<compile_context>
chip_gen: v6e
topology: v6e:2x2x1
jax: 0.10.0
libtpu: 0.0.40
codegen_flags: <defaults>
</compile_context>

<pallas_src>
import functools

import jax
import jax.numpy as jnp
from jax import lax
from jax.experimental import pallas as pl
from jax.experimental.pallas import tpu as pltpu


def _scan_kernel(x_ref, w_ref, b_ref, o_ref, *scratch, lb: int):
    """One grid step == `lb` scanned Linear layers.

    x_ref : (B, H)        input activations (consumed at grid step 0 only)
    w_ref : (lb, H, H)    this step's weights, PyTorch (out, in) layout
    b_ref : (lb, 1, H)    this step's biases
    o_ref : (B, H)        output; doubles as the resident f32 carry when the
                          activation dtype is f32 (constant output block index)
    scratch (optional) : (B, H) f32 VMEM carry for low-precision activations
    """
    step = pl.program_id(0)
    acc_ref = scratch[0] if scratch else o_ref

    @pl.when(step == 0)
    def _():
        acc_ref[...] = x_ref[...].astype(jnp.float32)

    w_dtype = w_ref.dtype  # static

    def body(i, h):
        w = w_ref[i]                        # (H_out, H_in), PyTorch layout
        b = b_ref[i]                        # (1, H_out)
        # Feed the MXU in the weight dtype (bf16 native on v5e/v6e/v7x);
        # accumulate in f32.
        lhs = h if w_dtype == jnp.float32 else h.astype(w_dtype)
        # y = h @ W.T : contract last dims of both operands -> no HBM transpose.
        y = lax.dot_general(lhs, w, (((1,), (1,)), ((), ())),
                            preferred_element_type=jnp.float32)
        return y + b.astype(jnp.float32)

    acc_ref[...] = lax.fori_loop(0, lb, body, acc_ref[...], unroll=True)

    if scratch:
        @pl.when(step == pl.num_programs(0) - 1)
        def _():
            o_ref[...] = acc_ref[...].astype(o_ref.dtype)


def _pick_layers_per_step(L, H, w_itemsize,
                          budget_bytes=24 * 1024 * 1024, max_unroll=8):
    """Largest divisor of L whose double-buffered weight+bias blocks fit the
    VMEM budget (safe on v7x's 64 MiB) and keep the unrolled body reasonable."""
    per_layer = 2 * (H * H + H) * w_itemsize      # double-buffered W + b
    cap = max(1, min(max_unroll, budget_bytes // per_layer))
    best = 1
    for d in range(1, L + 1):
        if L % d == 0 and d <= cap:
            best = d
    return best


@functools.partial(jax.jit, static_argnames=("layers_per_step",))
def scanned_linear_forward(x, w_stacked, b_stacked, *, layers_per_step=None):
    """x: (B, H);  w_stacked: (L, H_out, H_in) in PyTorch layout;  b_stacked: (L, H).

    Weights/bias are streamed in whatever dtype they are stored in (cast them to
    bf16 once at load time for the ~2x HBM win); accumulation is always f32.
    """
    B, H = x.shape
    L, H_out, H_in = w_stacked.shape
    assert L >= 1, "ScannedModule requires at least one layer"
    assert H_in == H and H_out == H and b_stacked.shape == (L, H)

    w_bytes = jnp.dtype(w_stacked.dtype).itemsize
    lb = layers_per_step or _pick_layers_per_step(L, H, w_bytes)
    assert L % lb == 0

    b3 = b_stacked.reshape(L, 1, H)          # explicit sublane axis (free reshape)

    needs_scratch = x.dtype != jnp.float32
    scratch_shapes = [pltpu.VMEM((B, H), jnp.float32)] if needs_scratch else []

    act_bytes = jnp.dtype(x.dtype).itemsize
    cost = pl.CostEstimate(
        flops=2 * B * H * H * L,
        transcendentals=0,
        bytes_accessed=(L * H * H * w_bytes
                        + L * H * jnp.dtype(b_stacked.dtype).itemsize
                        + 2 * B * H * act_bytes),
    )

    return pl.pallas_call(
        functools.partial(_scan_kernel, lb=lb),
        out_shape=jax.ShapeDtypeStruct((B, H), x.dtype),
        grid_spec=pltpu.PrefetchScalarGridSpec(
            num_scalar_prefetch=0,
            grid=(L // lb,),
            in_specs=[
                pl.BlockSpec((B, H), lambda s: (0, 0)),          # x (step 0 only)
                pl.BlockSpec((lb, H, H), lambda s: (s, 0, 0)),   # W[s*lb : (s+1)*lb]
                pl.BlockSpec((lb, 1, H), lambda s: (s, 0, 0)),   # b[s*lb : (s+1)*lb]
            ],
            out_specs=pl.BlockSpec((B, H), lambda s: (0, 0)),    # resident carry/out
            scratch_shapes=scratch_shapes,
        ),
        compiler_params=pltpu.CompilerParams(
            dimension_semantics=("arbitrary",),   # sequential layer dependency
        ),
        cost_estimate=cost,
    )(x, w_stacked, b3)


def _reference(x, w_stacked, b_stacked):
    """Pure-JAX mirror of ScannedModule.forward (lax.scan over Linear) with the
    same precision policy as the kernel: f32 carry, matmul in the weight dtype,
    f32 accumulation, final cast to x.dtype."""
    def step(h, wb):
        w, b = wb
        lhs = h if w.dtype == jnp.float32 else h.astype(w.dtype)
        y = lax.dot_general(lhs, w, (((1,), (1,)), ((), ())),
                            preferred_element_type=jnp.float32)
        return y + b.astype(jnp.float32), None

    h, _ = jax.lax.scan(step, x.astype(jnp.float32), (w_stacked, b_stacked))
    return h.astype(x.dtype)


if __name__ == "__main__":
    # Small shapes implied by the module: L stacked Linear(H, H) layers.
    B, H, L = 8, 128, 8

    key = jax.random.PRNGKey(0)
    kx, kw, kb = jax.random.split(key, 3)

    # Deterministic "PyTorch-like" init: uniform(-1/sqrt(H), 1/sqrt(H)).
    bound = 1.0 / (H ** 0.5)
    x = jax.random.normal(kx, (B, H), dtype=jnp.float32)
    w_stacked = jax.random.uniform(kw, (L, H, H), jnp.float32, -bound, bound)
    b_stacked = jax.random.uniform(kb, (L, H), jnp.float32, -bound, bound)

    # --- f32 weights: exact semantics of the original module -----------------
    out = jax.block_until_ready(scanned_linear_forward(x, w_stacked, b_stacked))
    ref = jax.block_until_ready(_reference(x, w_stacked, b_stacked))
    assert out.shape == (B, H) and out.dtype == x.dtype
    assert jnp.allclose(out, ref, atol=1e-4, rtol=1e-4), "f32 mismatch vs reference"

    # --- bf16-streamed weights (cast ONCE at "load time", outside the jit) ---
    w_bf16 = w_stacked.astype(jnp.bfloat16)
    b_bf16 = b_stacked.astype(jnp.bfloat16)
    out_bf = jax.block_until_ready(scanned_linear_forward(x, w_bf16, b_bf16))
    ref_bf = jax.block_until_ready(_reference(x, w_bf16, b_bf16))
    assert jnp.allclose(out_bf, ref_bf, atol=2e-2, rtol=2e-2), "bf16-weight mismatch"

    # --- bf16 activations: exercises the f32 scratch-carry path --------------
    x_bf16 = x.astype(jnp.bfloat16)
    out_lb = jax.block_until_ready(scanned_linear_forward(x_bf16, w_bf16, b_bf16))
    ref_lb = jax.block_until_ready(_reference(x_bf16, w_bf16, b_bf16))
    assert out_lb.dtype == jnp.bfloat16
    assert jnp.allclose(out_lb.astype(jnp.float32), ref_lb.astype(jnp.float32),
                        atol=2e-2, rtol=2e-2), "bf16-activation mismatch"

    print("KERNEL_OK")
</pallas_src>

<mosaic_0001>
module attributes {stable_mosaic.version = 11 : i64} {
  func.func @_scan_kernel(%arg0: i32, %arg1: memref<8x128xf32, #tpu.memory_space<vmem>>, %arg2: memref<8x128x128xf32, #tpu.memory_space<vmem>>, %arg3: memref<8x1x128xf32, #tpu.memory_space<vmem>>, %arg4: memref<8x128xf32, #tpu.memory_space<vmem>>) attributes {dimension_semantics = [#tpu.dimension_semantics<arbitrary>], iteration_bounds = array<i64: 1>, scalar_prefetch = 0 : i64, scratch_operands = 0 : i64, tpu.core_type = #tpu.core_type<tc>, window_params = [{pipeline_mode = #tpu.pipeline_mode<synchronous>, transform_indices = @transform_0, window_bounds = array<i64: 8, 128>}, {transform_indices = @transform_1, window_bounds = array<i64: 8, 128, 128>}, {transform_indices = @transform_2, window_bounds = array<i64: 8, 1, 128>}, {pipeline_mode = #tpu.pipeline_mode<synchronous>, transform_indices = @transform_3, window_bounds = array<i64: 8, 128>}]} {
    %c0_i32 = arith.constant 0 : i32
    %0 = arith.cmpi eq, %arg0, %c0_i32 : i32
    %1 = arith.extui %0 : i1 to i32
    %c0_i32_0 = arith.constant 0 : i32
    %2 = arith.cmpi ne, %1, %c0_i32_0 : i32
    scf.if %2 {
      %c0_44 = arith.constant 0 : index
      %c0_45 = arith.constant 0 : index
      %77 = vector.load %arg1[%c0_44, %c0_45] : memref<8x128xf32, #tpu.memory_space<vmem>>, vector<8x128xf32>
      %c0_46 = arith.constant 0 : index
      %c0_47 = arith.constant 0 : index
      %78 = vector.load %arg4[%c0_46, %c0_47] : memref<8x128xf32, #tpu.memory_space<vmem>>, vector<8x128xf32>
      tpu.vector_store %arg4[%c0_46, %c0_47], %77 {strides = array<i32>} : memref<8x128xf32, #tpu.memory_space<vmem>>, vector<8x128xf32>,
    } else {
    }
    %c0 = arith.constant 0 : index
    %c0_1 = arith.constant 0 : index
    %3 = vector.load %arg4[%c0, %c0_1] : memref<8x128xf32, #tpu.memory_space<vmem>>, vector<8x128xf32>
    %c0_i32_2 = arith.constant 0 : i32
    %4 = arith.index_cast %c0_i32_2 : i32 to index
    %c0_3 = arith.constant 0 : index
    %c0_4 = arith.constant 0 : index
    %5 = vector.load %arg2[%4, %c0_3, %c0_4] : memref<8x128x128xf32, #tpu.memory_space<vmem>>, vector<1x128x128xf32>
    %6 = vector.shape_cast %5 : vector<1x128x128xf32> to vector<128x128xf32>
    %7 = arith.index_cast %c0_i32_2 : i32 to index
    %c0_5 = arith.constant 0 : index
    %c0_6 = arith.constant 0 : index
    %8 = vector.load %arg3[%7, %c0_5, %c0_6] : memref<8x1x128xf32, #tpu.memory_space<vmem>>, vector<1x1x128xf32>
    %9 = vector.shape_cast %8 : vector<1x1x128xf32> to vector<1x128xf32>
    %cst = arith.constant dense<0.000000e+00> : vector<8x128xf32>
    %10 = tpu.matmul %3, %6, %cst {dimension_numbers = #tpu.dot_dimension_numbers<[1], [1], [0], [0], [0, 0, 1, 0], [], []>} : vector<8x128xf32>, vector<128x128xf32>, vector<8x128xf32> -> vector<8x128xf32>
    %11 = vector.broadcast %9 : vector<1x128xf32> to vector<8x128xf32>
    %12 = arith.addf %10, %11 : vector<8x128xf32>
    %c1_i32 = arith.constant 1 : i32
    %13 = arith.index_cast %c1_i32 : i32 to index
    %c0_7 = arith.constant 0 : index
    %c0_8 = arith.constant 0 : index
    %14 = vector.load %arg2[%13, %c0_7, %c0_8] : memref<8x128x128xf32, #tpu.memory_space<vmem>>, vector<1x128x128xf32>
    %15 = vector.shape_cast %14 : vector<1x128x128xf32> to vector<128x128xf32>
    %16 = arith.index_cast %c1_i32 : i32 to index
    %c0_9 = arith.constant 0 : index
    %c0_10 = arith.constant 0 : index
    %17 = vector.load %arg3[%16, %c0_9, %c0_10] : memref<8x1x128xf32, #tpu.memory_space<vmem>>, vector<1x1x128xf32>
    %18 = vector.shape_cast %17 : vector<1x1x128xf32> to vector<1x128xf32>
    %cst_11 = arith.constant dense<0.000000e+00> : vector<8x128xf32>
    %19 = tpu.matmul %12, %15, %cst_11 {dimension_numbers = #tpu.dot_dimension_numbers<[1], [1], [0], [0], [0, 0, 1, 0], [], []>} : vector<8x128xf32>, vector<128x128xf32>, vector<8x128xf32> -> vector<8x128xf32>
    %20 = vector.broadcast %18 : vector<1x128xf32> to vector<8x128xf32>
    %21 = arith.addf %19, %20 : vector<8x128xf32>
    %c2_i32 = arith.constant 2 : i32
    %22 = arith.index_cast %c2_i32 : i32 to index
    %c0_12 = arith.constant 0 : index
    %c0_13 = arith.constant 0 : index
    %23 = vector.load %arg2[%22, %c0_12, %c0_13] : memref<8x128x128xf32, #tpu.memory_space<vmem>>, vector<1x128x128xf32>
    %24 = vector.shape_cast %23 : vector<1x128x128xf32> to vector<128x128xf32>
    %25 = arith.index_cast %c2_i32 : i32 to index
    %c0_14 = arith.constant 0 : index
    %c0_15 = arith.constant 0 : index
    %26 = vector.load %arg3[%25, %c0_14, %c0_15] : memref<8x1x128xf32, #tpu.memory_space<vmem>>, vector<1x1x128xf32>
    %27 = vector.shape_cast %26 : vector<1x1x128xf32> to vector<1x128xf32>
    %cst_16 = arith.constant dense<0.000000e+00> : vector<8x128xf32>
    %28 = tpu.matmul %21, %24, %cst_16 {dimension_numbers = #tpu.dot_dimension_numbers<[1], [1], [0], [0], [0, 0, 1, 0], [], []>} : vector<8x128xf32>, vector<128x128xf32>, vector<8x128xf32> -> vector<8x128xf32>
    %29 = vector.broadcast %27 : vector<1x128xf32> to vector<8x128xf32>
    %30 = arith.addf %28, %29 : vector<8x128xf32>
    %c3_i32 = arith.constant 3 : i32
    %31 = arith.index_cast %c3_i32 : i32 to index
    %c0_17 = arith.constant 0 : index
    %c0_18 = arith.constant 0 : index
    %32 = vector.load %arg2[%31, %c0_17, %c0_18] : memref<8x128x128xf32, #tpu.memory_space<vmem>>, vector<1x128x128xf32>
    %33 = vector.shape_cast %32 : vector<1x128x128xf32> to vector<128x128xf32>
    %34 = arith.index_cast %c3_i32 : i32 to index
    %c0_19 = arith.constant 0 : index
    %c0_20 = arith.constant 0 : index
    %35 = vector.load %arg3[%34, %c0_19, %c0_20] : memref<8x1x128xf32, #tpu.memory_space<vmem>>, vector<1x1x128xf32>
    %36 = vector.shape_cast %35 : vector<1x1x128xf32> to vector<1x128xf32>
    %cst_21 = arith.constant dense<0.000000e+00> : vector<8x128xf32>
    %37 = tpu.matmul %30, %33, %cst_21 {dimension_numbers = #tpu.dot_dimension_numbers<[1], [1], [0], [0], [0, 0, 1, 0], [], []>} : vector<8x128xf32>, vector<128x128xf32>, vector<8x128xf32> -> vector<8x128xf32>
    %38 = vector.broadcast %36 : vector<1x128xf32> to vector<8x128xf32>
    %39 = arith.addf %37, %38 : vector<8x128xf32>
    %c4_i32 = arith.constant 4 : i32
    %40 = arith.index_cast %c4_i32 : i32 to index
    %c0_22 = arith.constant 0 : index
    %c0_23 = arith.constant 0 : index
    %41 = vector.load %arg2[%40, %c0_22, %c0_23] : memref<8x128x128xf32, #tpu.memory_space<vmem>>, vector<1x128x128xf32>
    %42 = vector.shape_cast %41 : vector<1x128x128xf32> to vector<128x128xf32>
    %43 = arith.index_cast %c4_i32 : i32 to index
    %c0_24 = arith.constant 0 : index
    %c0_25 = arith.constant 0 : index
    %44 = vector.load %arg3[%43, %c0_24, %c0_25] : memref<8x1x128xf32, #tpu.memory_space<vmem>>, vector<1x1x128xf32>
    %45 = vector.shape_cast %44 : vector<1x1x128xf32> to vector<1x128xf32>
    %cst_26 = arith.constant dense<0.000000e+00> : vector<8x128xf32>
    %46 = tpu.matmul %39, %42, %cst_26 {dimension_numbers = #tpu.dot_dimension_numbers<[1], [1], [0], [0], [0, 0, 1, 0], [], []>} : vector<8x128xf32>, vector<128x128xf32>, vector<8x128xf32> -> vector<8x128xf32>
    %47 = vector.broadcast %45 : vector<1x128xf32> to vector<8x128xf32>
    %48 = arith.addf %46, %47 : vector<8x128xf32>
    %c5_i32 = arith.constant 5 : i32
    %49 = arith.index_cast %c5_i32 : i32 to index
    %c0_27 = arith.constant 0 : index
    %c0_28 = arith.constant 0 : index
    %50 = vector.load %arg2[%49, %c0_27, %c0_28] : memref<8x128x128xf32, #tpu.memory_space<vmem>>, vector<1x128x128xf32>
    %51 = vector.shape_cast %50 : vector<1x128x128xf32> to vector<128x128xf32>
    %52 = arith.index_cast %c5_i32 : i32 to index
    %c0_29 = arith.constant 0 : index
    %c0_30 = arith.constant 0 : index
    %53 = vector.load %arg3[%52, %c0_29, %c0_30] : memref<8x1x128xf32, #tpu.memory_space<vmem>>, vector<1x1x128xf32>
    %54 = vector.shape_cast %53 : vector<1x1x128xf32> to vector<1x128xf32>
    %cst_31 = arith.constant dense<0.000000e+00> : vector<8x128xf32>
    %55 = tpu.matmul %48, %51, %cst_31 {dimension_numbers = #tpu.dot_dimension_numbers<[1], [1], [0], [0], [0, 0, 1, 0], [], []>} : vector<8x128xf32>, vector<128x128xf32>, vector<8x128xf32> -> vector<8x128xf32>
    %56 = vector.broadcast %54 : vector<1x128xf32> to vector<8x128xf32>
    %57 = arith.addf %55, %56 : vector<8x128xf32>
    %c6_i32 = arith.constant 6 : i32
    %58 = arith.index_cast %c6_i32 : i32 to index
    %c0_32 = arith.constant 0 : index
    %c0_33 = arith.constant 0 : index
    %59 = vector.load %arg2[%58, %c0_32, %c0_33] : memref<8x128x128xf32, #tpu.memory_space<vmem>>, vector<1x128x128xf32>
    %60 = vector.shape_cast %59 : vector<1x128x128xf32> to vector<128x128xf32>
    %61 = arith.index_cast %c6_i32 : i32 to index
    %c0_34 = arith.constant 0 : index
    %c0_35 = arith.constant 0 : index
    %62 = vector.load %arg3[%61, %c0_34, %c0_35] : memref<8x1x128xf32, #tpu.memory_space<vmem>>, vector<1x1x128xf32>
    %63 = vector.shape_cast %62 : vector<1x1x128xf32> to vector<1x128xf32>
    %cst_36 = arith.constant dense<0.000000e+00> : vector<8x128xf32>
    %64 = tpu.matmul %57, %60, %cst_36 {dimension_numbers = #tpu.dot_dimension_numbers<[1], [1], [0], [0], [0, 0, 1, 0], [], []>} : vector<8x128xf32>, vector<128x128xf32>, vector<8x128xf32> -> vector<8x128xf32>
    %65 = vector.broadcast %63 : vector<1x128xf32> to vector<8x128xf32>
    %66 = arith.addf %64, %65 : vector<8x128xf32>
    %c7_i32 = arith.constant 7 : i32
    %67 = arith.index_cast %c7_i32 : i32 to index
    %c0_37 = arith.constant 0 : index
    %c0_38 = arith.constant 0 : index
    %68 = vector.load %arg2[%67, %c0_37, %c0_38] : memref<8x128x128xf32, #tpu.memory_space<vmem>>, vector<1x128x128xf32>
    %69 = vector.shape_cast %68 : vector<1x128x128xf32> to vector<128x128xf32>
    %70 = arith.index_cast %c7_i32 : i32 to index
    %c0_39 = arith.constant 0 : index
    %c0_40 = arith.constant 0 : index
    %71 = vector.load %arg3[%70, %c0_39, %c0_40] : memref<8x1x128xf32, #tpu.memory_space<vmem>>, vector<1x1x128xf32>
    %72 = vector.shape_cast %71 : vector<1x1x128xf32> to vector<1x128xf32>
    %cst_41 = arith.constant dense<0.000000e+00> : vector<8x128xf32>
    %73 = tpu.matmul %66, %69, %cst_41 {dimension_numbers = #tpu.dot_dimension_numbers<[1], [1], [0], [0], [0, 0, 1, 0], [], []>} : vector<8x128xf32>, vector<128x128xf32>, vector<8x128xf32> -> vector<8x128xf32>
    %74 = vector.broadcast %72 : vector<1x128xf32> to vector<8x128xf32>
    %75 = arith.addf %73, %74 : vector<8x128xf32>
    %c8_i32 = arith.constant 8 : i32
    %c0_42 = arith.constant 0 : index
    %c0_43 = arith.constant 0 : index
    %76 = vector.load %arg4[%c0_42, %c0_43] : memref<8x128xf32, #tpu.memory_space<vmem>>, vector<8x128xf32>
    tpu.vector_store %arg4[%c0_42, %c0_43], %75 {strides = array<i32>} : memref<8x128xf32, #tpu.memory_space<vmem>>, vector<8x128xf32>,
    return
  }
  func.func @transform_0(%arg0: i32) -> (i32, i32) {
    %c0_i32 = arith.constant 0 : i32
    %c0_i32_0 = arith.constant 0 : i32
    %c0_i32_1 = arith.constant 0 : i32
    return %c0_i32, %c0_i32_0 : i32, i32
  }
  func.func @transform_1(%arg0: i32) -> (i32, i32, i32) {
    %c0_i32 = arith.constant 0 : i32
    %c0_i32_0 = arith.constant 0 : i32
    %c0_i32_1 = arith.constant 0 : i32
    return %arg0, %c0_i32, %c0_i32_0 : i32, i32, i32
  }
  func.func @transform_2(%arg0: i32) -> (i32, i32, i32) {
    %c0_i32 = arith.constant 0 : i32
    %c0_i32_0 = arith.constant 0 : i32
    %c0_i32_1 = arith.constant 0 : i32
    return %arg0, %c0_i32, %c0_i32_0 : i32, i32, i32
  }
  func.func @transform_3(%arg0: i32) -> (i32, i32) {
    %c0_i32 = arith.constant 0 : i32
    %c0_i32_0 = arith.constant 0 : i32
    %c0_i32_1 = arith.constant 0 : i32
    return %c0_i32, %c0_i32_0 : i32, i32
  }
}

</mosaic_0001>

<llo_original>
// kernel: scanned_linear_forward.1
$region0: #{scanned_linear_forward.1}
  #allocation0 [shape = 'u32[]', space=smem, size = 0x4, offset = 0x4, fixed_abs, tag = 'smem constant byte address 0x4 - core index']
  #allocation1 [shape = 'u32[144,128]{1,0:T(1,128)}', space=vmem, size = 0x12000, scoped, tag = 'internal scratch']
  %s0 = inlined_call_operand.hbm [shape: f32[8,128], index: 0, kind: input, shape index: {}]
  %s1 = inlined_call_operand.hbm [shape: f32[8,128,128], index: 1, kind: input, shape index: {}]
  %s2 = inlined_call_operand.hbm [shape: f32[8,1,128], index: 2, kind: input, shape index: {}]
  %s3 = inlined_call_operand.hbm [shape: f32[8,128], index: 3, kind: output, shape index: {}]
  %s4 = sld [smem:[#allocation0]]
  $region38: #{scanned_linear_forward.1} parent=0
    _
  %s6 = ssub.s32 1, %s4
  %s7 = scalar_select 0, %s6, %s4
  $region1: #{scanned_linear_forward.1} parent=0
    #allocation2 [shape = 'u8[4096]{0}', space=vmem, size = 0x1000, scoped, tag = 'input window, operand 0, single buffered']
    #allocation3 [shape = 's32[1]{0}', space=sflag, size = 0x4, scoped, tag = 'scoped memory for scanned_linear_forward.1']
    #allocation4 [shape = 's32[1]{0}', space=sflag, size = 0x4, scoped, tag = 'scoped memory for scanned_linear_forward.1']
    #allocation5 [shape = 'u8[524288]{0}', space=vmem, size = 0x80000, scoped, tag = 'input window, operand 1, single buffered']
    #allocation6 [shape = 's32[1]{0}', space=sflag, size = 0x4, scoped, tag = 'scoped memory for scanned_linear_forward.1']
    #allocation7 [shape = 'u8[4096]{0}', space=vmem, size = 0x1000, scoped, tag = 'input window, operand 2, single buffered']
    #allocation8 [shape = 'u8[4096]{0}', space=vmem, size = 0x1000, scoped, tag = 'output window, operand 0, single buffered']
    %8 = vsyncpa [#allocation3], 0
    %9 = vsyncpa [#allocation6], 0
    %10 = vsyncpa [#allocation4], 0
    // Predicated region
    $region2: #{scanned_linear_forward.1} parent=1 // pred_check
      _
    $region3: #{scanned_linear_forward.1} parent=1 // pred_check_branch
      %12 = sbr.rel (0) target = $region5
    $region4: #{scanned_linear_forward.1} parent=1 // pred_region
      %s14 = ssub.s32 128, 128
      %15 = vsyncadd [#allocation3], %s14
      %s17 = sshll.u32 [#allocation2], 4
      %s18 = int_to_ptr.vmem [resolvable:$true] %s17
      %20 = dma.hbm_to_vmem [thread:$0]  %s0, 128, %s18, [#allocation3]
    $region5: #{scanned_linear_forward.1} parent=1 // pred_fallthru
      _
    // Predicated region
    $region6: #{scanned_linear_forward.1} parent=1 // pred_check
      _
    $region7: #{scanned_linear_forward.1} parent=1 // pred_check_branch
      %22 = sbr.rel (0) target = $region9
    $region8: #{scanned_linear_forward.1} parent=1 // pred_region
      %s24 = ssub.s32 16384, 16384
      %25 = vsyncadd [#allocation6], %s24
      %s26 = sshll.u32 [#allocation5], 4
      %s27 = int_to_ptr.vmem [resolvable:$true] %s26
      %32 = dma.hbm_to_vmem [thread:$0]  %s1, 16384, %s27, [#allocation6], 128, 128, 8
    $region9: #{scanned_linear_forward.1} parent=1 // pred_fallthru
      _
    // Predicated region
    $region10: #{scanned_linear_forward.1} parent=1 // pred_check
      _
    $region11: #{scanned_linear_forward.1} parent=1 // pred_check_branch
      %34 = sbr.rel (0) target = $region13
    $region12: #{scanned_linear_forward.1} parent=1 // pred_region
      %s36 = ssub.s32 128, 128
      %37 = vsyncadd [#allocation6], %s36
      %s38 = sshll.u32 [#allocation7], 4
      %s39 = int_to_ptr.vmem [resolvable:$true] %s38
      %44 = dma.hbm_to_vmem [thread:$0]  %s2, 128, %s39, [#allocation6], 16, 16, 1
    $region13: #{scanned_linear_forward.1} parent=1 // pred_fallthru
      _
    // Predicated region
    $region14: #{scanned_linear_forward.1} parent=1 // pred_check
      _
    $region15: #{scanned_linear_forward.1} parent=1 // pred_check_branch
      %46 = sbr.rel (0) target = $region17
    $region16: #{scanned_linear_forward.1} parent=1 // pred_region
      %47 = dma.done [#allocation3], 128
    $region17: #{scanned_linear_forward.1} parent=1 // pred_fallthru
      _
    // Predicated region
    $region18: #{scanned_linear_forward.1} parent=1 // pred_check
      _
    $region19: #{scanned_linear_forward.1} parent=1 // pred_check_branch
      %49 = sbr.rel (0) target = $region21
    $region20: #{scanned_linear_forward.1} parent=1 // pred_region
      %50 = dma.done [#allocation6], 16384
    $region21: #{scanned_linear_forward.1} parent=1 // pred_fallthru
      _
    // Predicated region
    $region22: #{scanned_linear_forward.1} parent=1 // pred_check
      _
    $region23: #{scanned_linear_forward.1} parent=1 // pred_check_branch
      %52 = sbr.rel (0) target = $region25
    $region24: #{scanned_linear_forward.1} parent=1 // pred_region
      %53 = dma.done [#allocation6], 128
    $region25: #{scanned_linear_forward.1} parent=1 // pred_fallthru
      _
    %p54 = scmp.eq.s32.totalorder 0, 0
    // Predicated region
    $region26: #{scanned_linear_forward.1} parent=1 // pred_check
      %p55 = pneg %p54
    $region27: #{scanned_linear_forward.1} parent=1 // pred_check_branch
      %57 = sbr.rel (%p55) target = $region29
    $region28: #{scanned_linear_forward.1} parent=1 // pred_region
      %v58 = vld [vmem:[#allocation2] sm:$0xff]
      %59 = vst [vmem:[#allocation8] sm:$0xff] %v58
    $region29: #{scanned_linear_forward.1} parent=1 // pred_fallthru
      _
    %v60 = vld [vmem:[#allocation8] sm:$0xff]
    %v61 = vld [vmem:[#allocation5] sm:$0xff]
    %v62 = vld [vmem:[#allocation5 + $0x8] sm:$0xff]
    %v63 = vld [vmem:[#allocation5 + $0x10] sm:$0xff]
    %v64 = vld [vmem:[#allocation5 + $0x18] sm:$0xff]
    %v65 = vld [vmem:[#allocation5 + $0x20] sm:$0xff]
    %v66 = vld [vmem:[#allocation5 + $0x28] sm:$0xff]
    %v67 = vld [vmem:[#allocation5 + $0x30] sm:$0xff]
    %v68 = vld [vmem:[#allocation5 + $0x38] sm:$0xff]
    %v69 = vld [vmem:[#allocation5 + $0x40] sm:$0xff]
    %v70 = vld [vmem:[#allocation5 + $0x48] sm:$0xff]
    %v71 = vld [vmem:[#allocation5 + $0x50] sm:$0xff]
    %v72 = vld [vmem:[#allocation5 + $0x58] sm:$0xff]
    %v73 = vld [vmem:[#allocation5 + $0x60] sm:$0xff]
    %v74 = vld [vmem:[#allocation5 + $0x68] sm:$0xff]
    %v75 = vld [vmem:[#allocation5 + $0x70] sm:$0xff]
    %v76 = vld [vmem:[#allocation5 + $0x78] sm:$0xff]
    %v77 = vld [vmem:[#allocation7] sm:$0x1]
    %v79 = vlaneseq
    %v80 = vshrl.u32 %v79, 7
    %v81 = vsub.s32 0, %v80
    %v82 = vrot.slane %v77, %v81
    %84 = vmatprep.subr.mxu0 0.0
    %85 = vmatpush1.xpose.msra.mxu0 %v76
    %86 = vmatprep.subr.mxu0 0.0
    %87 = vmatpush1.xpose.msra.mxu0 %v75
    %88 = vmatprep.subr.mxu0 0.0
    %89 = vmatpush1.xpose.msra.mxu0 %v74
    %90 = vmatprep.subr.mxu0 0.0
    %91 = vmatpush1.xpose.msra.mxu0 %v73
    %92 = vmatprep.subr.mxu0 0.0
    %93 = vmatpush1.xpose.msra.mxu0 %v72
    %94 = vmatprep.subr.mxu0 0.0
    %95 = vmatpush1.xpose.msra.mxu0 %v71
    %96 = vmatprep.subr.mxu0 0.0
    %97 = vmatpush1.xpose.msra.mxu0 %v70
    %98 = vmatprep.subr.mxu0 0.0
    %99 = vmatpush1.xpose.msra.mxu0 %v69
    %100 = vmatprep.subr.mxu0 0.0
    %101 = vmatpush1.xpose.msra.mxu0 %v68
    %102 = vmatprep.subr.mxu0 0.0
    %103 = vmatpush1.xpose.msra.mxu0 %v67
    %104 = vmatprep.subr.mxu0 0.0
    %105 = vmatpush1.xpose.msra.mxu0 %v66
    %106 = vmatprep.subr.mxu0 0.0
    %107 = vmatpush1.xpose.msra.mxu0 %v65
    %108 = vmatprep.subr.mxu0 0.0
    %109 = vmatpush1.xpose.msra.mxu0 %v64
    %110 = vmatprep.subr.mxu0 0.0
    %111 = vmatpush1.xpose.msra.mxu0 %v63
    %112 = vmatprep.subr.mxu0 0.0
    %113 = vmatpush1.xpose.msra.mxu0 %v62
    %114 = vmatprep.subr.mxu0 0.0
    %115 = vmatpush1.xpose.msra.mxu0 %v61
    %116 = vmatprep.subr.mxu0 0.0
    %117 = vmatpush2.xpose.msra.mxu0 0.0
    %118 = vmatprep.subr.mxu0 0.0
    %119 = vmatpush2.xpose.msra.mxu0 0.0
    %120 = vmatprep.subr.mxu0 0.0
    %121 = vmatpush2.xpose.msra.mxu0 0.0
    %122 = vmatprep.subr.mxu0 0.0
    %123 = vmatpush2.xpose.msra.mxu0 0.0
    %124 = vmatprep.subr.mxu0 0.0
    %125 = vmatpush2.xpose.msra.mxu0 0.0
    %126 = vmatprep.subr.mxu0 0.0
    %127 = vmatpush2.xpose.msra.mxu0 0.0
    %128 = vmatprep.subr.mxu0 0.0
    %129 = vmatpush2.xpose.msra.mxu0 0.0
    %130 = vmatprep.subr.mxu0 0.0
    %131 = vmatpush2.xpose.msra.mxu0 0.0
    %132 = vmatprep.subr.mxu0 0.0
    %133 = vmatpush2.xpose.msra.mxu0 0.0
    %134 = vmatprep.subr.mxu0 0.0
    %135 = vmatpush2.xpose.msra.mxu0 0.0
    %136 = vmatprep.subr.mxu0 0.0
    %137 = vmatpush2.xpose.msra.mxu0 0.0
    %138 = vmatprep.subr.mxu0 0.0
    %139 = vmatpush2.xpose.msra.mxu0 0.0
    %140 = vmatprep.subr.mxu0 0.0
    %141 = vmatpush2.xpose.msra.mxu0 0.0
    %142 = vmatprep.subr.mxu0 0.0
    %143 = vmatpush2.xpose.msra.mxu0 0.0
    %144 = vmatprep.subr.mxu0 0.0
    %145 = vmatpush2.xpose.msra.mxu0 0.0
    %146 = vmatprep.subr.mxu0 0.0
    %147 = vmatpush2.xpose.msra.mxu0 0.0
    %148 = vmatprep.mubr.f32.mxu0 0.0
    %149 = vmatmul.mubr.f32.gmra.mxu0 %v60
    %v150 = vpop.f32.mrf.mxu0
    %v151 = vadd.f32 %v82, %v150
    %v152 = vpop.f32.mrf.mxu0
    %153 = vdwg.mxu0
    %s154 = scalar_lea.vmem [#allocation5], 128
    %v155 = vld [vmem:[%s154] sm:$0xff]
    %v156 = vld [vmem:[%s154 + $0x8] sm:$0xff]
    %v157 = vld [vmem:[%s154 + $0x10] sm:$0xff]
    %v158 = vld [vmem:[%s154 + $0x18] sm:$0xff]
    %v159 = vld [vmem:[%s154 + $0x20] sm:$0xff]
    %v160 = vld [vmem:[%s154 + $0x28] sm:$0xff]
    %v161 = vld [vmem:[%s154 + $0x30] sm:$0xff]
    %v162 = vld [vmem:[%s154 + $0x38] sm:$0xff]
    %v163 = vld [vmem:[%s154 + $0x40] sm:$0xff]
    %v164 = vld [vmem:[%s154 + $0x48] sm:$0xff]
    %v165 = vld [vmem:[%s154 + $0x50] sm:$0xff]
    %v166 = vld [vmem:[%s154 + $0x58] sm:$0xff]
    %v167 = vld [vmem:[%s154 + $0x60] sm:$0xff]
    %v168 = vld [vmem:[%s154 + $0x68] sm:$0xff]
    %v169 = vld [vmem:[%s154 + $0x70] sm:$0xff]
    %v170 = vld [vmem:[%s154 + $0x78] sm:$0xff]
    %s171 = scalar_lea.vmem [#allocation7], 1
    %v172 = vld [vmem:[%s171] sm:$0x1]
    %v174 = vlaneseq
    %v175 = vshrl.u32 %v174, 7
    %v176 = vsub.s32 0, %v175
    %v177 = vrot.slane %v172, %v176
    %179 = vmatprep.subr.mxu0 0.0
    %180 = vmatpush1.xpose.msra.mxu0 %v170
    %181 = vmatprep.subr.mxu0 0.0
    %182 = vmatpush1.xpose.msra.mxu0 %v169
    %183 = vmatprep.subr.mxu0 0.0
    %184 = vmatpush1.xpose.msra.mxu0 %v168
    %185 = vmatprep.subr.mxu0 0.0
    %186 = vmatpush1.xpose.msra.mxu0 %v167
    %187 = vmatprep.subr.mxu0 0.0
    %188 = vmatpush1.xpose.msra.mxu0 %v166
    %189 = vmatprep.subr.mxu0 0.0
    %190 = vmatpush1.xpose.msra.mxu0 %v165
    %191 = vmatprep.subr.mxu0 0.0
    %192 = vmatpush1.xpose.msra.mxu0 %v164
    %193 = vmatprep.subr.mxu0 0.0
    %194 = vmatpush1.xpose.msra.mxu0 %v163
    %195 = vmatprep.subr.mxu0 0.0
    %196 = vmatpush1.xpose.msra.mxu0 %v162
    %197 = vmatprep.subr.mxu0 0.0
    %198 = vmatpush1.xpose.msra.mxu0 %v161
    %199 = vmatprep.subr.mxu0 0.0
    %200 = vmatpush1.xpose.msra.mxu0 %v160
    %201 = vmatprep.subr.mxu0 0.0
    %202 = vmatpush1.xpose.msra.mxu0 %v159
    %203 = vmatprep.subr.mxu0 0.0
    %204 = vmatpush1.xpose.msra.mxu0 %v158
    %205 = vmatprep.subr.mxu0 0.0
    %206 = vmatpush1.xpose.msra.mxu0 %v157
    %207 = vmatprep.subr.mxu0 0.0
    %208 = vmatpush1.xpose.msra.mxu0 %v156
    %209 = vmatprep.subr.mxu0 0.0
    %210 = vmatpush1.xpose.msra.mxu0 %v155
    %211 = vmatprep.subr.mxu0 0.0
    %212 = vmatpush2.xpose.msra.mxu0 0.0
    %213 = vmatprep.subr.mxu0 0.0
    %214 = vmatpush2.xpose.msra.mxu0 0.0
    %215 = vmatprep.subr.mxu0 0.0
    %216 = vmatpush2.xpose.msra.mxu0 0.0
    %217 = vmatprep.subr.mxu0 0.0
    %218 = vmatpush2.xpose.msra.mxu0 0.0
    %219 = vmatprep.subr.mxu0 0.0
    %220 = vmatpush2.xpose.msra.mxu0 0.0
    %221 = vmatprep.subr.mxu0 0.0
    %222 = vmatpush2.xpose.msra.mxu0 0.0
    %223 = vmatprep.subr.mxu0 0.0
    %224 = vmatpush2.xpose.msra.mxu0 0.0
    %225 = vmatprep.subr.mxu0 0.0
    %226 = vmatpush2.xpose.msra.mxu0 0.0
    %227 = vmatprep.subr.mxu0 0.0
    %228 = vmatpush2.xpose.msra.mxu0 0.0
    %229 = vmatprep.subr.mxu0 0.0
    %230 = vmatpush2.xpose.msra.mxu0 0.0
    %231 = vmatprep.subr.mxu0 0.0
    %232 = vmatpush2.xpose.msra.mxu0 0.0
    %233 = vmatprep.subr.mxu0 0.0
    %234 = vmatpush2.xpose.msra.mxu0 0.0
    %235 = vmatprep.subr.mxu0 0.0
    %236 = vmatpush2.xpose.msra.mxu0 0.0
    %237 = vmatprep.subr.mxu0 0.0
    %238 = vmatpush2.xpose.msra.mxu0 0.0
    %239 = vmatprep.subr.mxu0 0.0
    %240 = vmatpush2.xpose.msra.mxu0 0.0
    %241 = vmatprep.subr.mxu0 0.0
    %242 = vmatpush2.xpose.msra.mxu0 0.0
    %243 = vmatprep.mubr.f32.mxu0 0.0
    %244 = vmatmul.mubr.f32.gmra.mxu0 %v151
    %v245 = vpop.f32.mrf.mxu0
    %v246 = vadd.f32 %v177, %v245
    %v247 = vpop.f32.mrf.mxu0
    %248 = vdwg.mxu0
    %s249 = scalar_lea.vmem [#allocation5], 256
    %v250 = vld [vmem:[%s249] sm:$0xff]
    %v251 = vld [vmem:[%s249 + $0x8] sm:$0xff]
    %v252 = vld [vmem:[%s249 + $0x10] sm:$0xff]
    %v253 = vld [vmem:[%s249 + $0x18] sm:$0xff]
    %v254 = vld [vmem:[%s249 + $0x20] sm:$0xff]
    %v255 = vld [vmem:[%s249 + $0x28] sm:$0xff]
    %v256 = vld [vmem:[%s249 + $0x30] sm:$0xff]
    %v257 = vld [vmem:[%s249 + $0x38] sm:$0xff]
    %v258 = vld [vmem:[%s249 + $0x40] sm:$0xff]
    %v259 = vld [vmem:[%s249 + $0x48] sm:$0xff]
    %v260 = vld [vmem:[%s249 + $0x50] sm:$0xff]
    %v261 = vld [vmem:[%s249 + $0x58] sm:$0xff]
    %v262 = vld [vmem:[%s249 + $0x60] sm:$0xff]
    %v263 = vld [vmem:[%s249 + $0x68] sm:$0xff]
    %v264 = vld [vmem:[%s249 + $0x70] sm:$0xff]
    %v265 = vld [vmem:[%s249 + $0x78] sm:$0xff]
    %s266 = scalar_lea.vmem [#allocation7], 2
    %v267 = vld [vmem:[%s266] sm:$0x1]
    %v269 = vlaneseq
    %v270 = vshrl.u32 %v269, 7
    %v271 = vsub.s32 0, %v270
    %v272 = vrot.slane %v267, %v271
    %274 = vmatprep.subr.mxu0 0.0
    %275 = vmatpush1.xpose.msra.mxu0 %v265
    %276 = vmatprep.subr.mxu0 0.0
    %277 = vmatpush1.xpose.msra.mxu0 %v264
    %278 = vmatprep.subr.mxu0 0.0
    %279 = vmatpush1.xpose.msra.mxu0 %v263
    %280 = vmatprep.subr.mxu0 0.0
    %281 = vmatpush1.xpose.msra.mxu0 %v262
    %282 = vmatprep.subr.mxu0 0.0
    %283 = vmatpush1.xpose.msra.mxu0 %v261
    %284 = vmatprep.subr.mxu0 0.0
    %285 = vmatpush1.xpose.msra.mxu0 %v260
    %286 = vmatprep.subr.mxu0 0.0
    %287 = vmatpush1.xpose.msra.mxu0 %v259
    %288 = vmatprep.subr.mxu0 0.0
    %289 = vmatpush1.xpose.msra.mxu0 %v258
    %290 = vmatprep.subr.mxu0 0.0
    %291 = vmatpush1.xpose.msra.mxu0 %v257
    %292 = vmatprep.subr.mxu0 0.0
    %293 = vmatpush1.xpose.msra.mxu0 %v256
    %294 = vmatprep.subr.mxu0 0.0
    %295 = vmatpush1.xpose.msra.mxu0 %v255
    %296 = vmatprep.subr.mxu0 0.0
    %297 = vmatpush1.xpose.msra.mxu0 %v254
    %298 = vmatprep.subr.mxu0 0.0
    %299 = vmatpush1.xpose.msra.mxu0 %v253
    %300 = vmatprep.subr.mxu0 0.0
    %301 = vmatpush1.xpose.msra.mxu0 %v252
    %302 = vmatprep.subr.mxu0 0.0
    %303 = vmatpush1.xpose.msra.mxu0 %v251
    %304 = vmatprep.subr.mxu0 0.0
    %305 = vmatpush1.xpose.msra.mxu0 %v250
    %306 = vmatprep.subr.mxu0 0.0
    %307 = vmatpush2.xpose.msra.mxu0 0.0
    %308 = vmatprep.subr.mxu0 0.0
    %309 = vmatpush2.xpose.msra.mxu0 0.0
    %310 = vmatprep.subr.mxu0 0.0
    %311 = vmatpush2.xpose.msra.mxu0 0.0
    %312 = vmatprep.subr.mxu0 0.0
    %313 = vmatpush2.xpose.msra.mxu0 0.0
    %314 = vmatprep.subr.mxu0 0.0
    %315 = vmatpush2.xpose.msra.mxu0 0.0
    %316 = vmatprep.subr.mxu0 0.0
    %317 = vmatpush2.xpose.msra.mxu0 0.0
    %318 = vmatprep.subr.mxu0 0.0
    %319 = vmatpush2.xpose.msra.mxu0 0.0
    %320 = vmatprep.subr.mxu0 0.0
    %321 = vmatpush2.xpose.msra.mxu0 0.0
    %322 = vmatprep.subr.mxu0 0.0
    %323 = vmatpush2.xpose.msra.mxu0 0.0
    %324 = vmatprep.subr.mxu0 0.0
    %325 = vmatpush2.xpose.msra.mxu0 0.0
    %326 = vmatprep.subr.mxu0 0.0
    %327 = vmatpush2.xpose.msra.mxu0 0.0
    %328 = vmatprep.subr.mxu0 0.0
    %329 = vmatpush2.xpose.msra.mxu0 0.0
    %330 = vmatprep.subr.mxu0 0.0
    %331 = vmatpush2.xpose.msra.mxu0 0.0
    %332 = vmatprep.subr.mxu0 0.0
    %333 = vmatpush2.xpose.msra.mxu0 0.0
    %334 = vmatprep.subr.mxu0 0.0
    %335 = vmatpush2.xpose.msra.mxu0 0.0
    %336 = vmatprep.subr.mxu0 0.0
    %337 = vmatpush2.xpose.msra.mxu0 0.0
    %338 = vmatprep.mubr.f32.mxu0 0.0
    %339 = vmatmul.mubr.f32.gmra.mxu0 %v246
    %v340 = vpop.f32.mrf.mxu0
    %v341 = vadd.f32 %v272, %v340
    %v342 = vpop.f32.mrf.mxu0
    %343 = vdwg.mxu0
    %s344 = scalar_lea.vmem [#allocation5], 384
    %v345 = vld [vmem:[%s344] sm:$0xff]
    %v346 = vld [vmem:[%s344 + $0x8] sm:$0xff]
    %v347 = vld [vmem:[%s344 + $0x10] sm:$0xff]
    %v348 = vld [vmem:[%s344 + $0x18] sm:$0xff]
    %v349 = vld [vmem:[%s344 + $0x20] sm:$0xff]
    %v350 = vld [vmem:[%s344 + $0x28] sm:$0xff]
    %v351 = vld [vmem:[%s344 + $0x30] sm:$0xff]
    %v352 = vld [vmem:[%s344 + $0x38] sm:$0xff]
    %v353 = vld [vmem:[%s344 + $0x40] sm:$0xff]
    %v354 = vld [vmem:[%s344 + $0x48] sm:$0xff]
    %v355 = vld [vmem:[%s344 + $0x50] sm:$0xff]
    %v356 = vld [vmem:[%s344 + $0x58] sm:$0xff]
    %v357 = vld [vmem:[%s344 + $0x60] sm:$0xff]
    %v358 = vld [vmem:[%s344 + $0x68] sm:$0xff]
    %v359 = vld [vmem:[%s344 + $0x70] sm:$0xff]
    %v360 = vld [vmem:[%s344 + $0x78] sm:$0xff]
    %s361 = scalar_lea.vmem [#allocation7], 3
    %v362 = vld [vmem:[%s361] sm:$0x1]
    %v364 = vlaneseq
    %v365 = vshrl.u32 %v364, 7
    %v366 = vsub.s32 0, %v365
    %v367 = vrot.slane %v362, %v366
    %369 = vmatprep.subr.mxu0 0.0
    %370 = vmatpush1.xpose.msra.mxu0 %v360
    %371 = vmatprep.subr.mxu0 0.0
    %372 = vmatpush1.xpose.msra.mxu0 %v359
    %373 = vmatprep.subr.mxu0 0.0
    %374 = vmatpush1.xpose.msra.mxu0 %v358
    %375 = vmatprep.subr.mxu0 0.0
    %376 = vmatpush1.xpose.msra.mxu0 %v357
    %377 = vmatprep.subr.mxu0 0.0
    %378 = vmatpush1.xpose.msra.mxu0 %v356
    %379 = vmatprep.subr.mxu0 0.0
    %380 = vmatpush1.xpose.msra.mxu0 %v355
    %381 = vmatprep.subr.mxu0 0.0
    %382 = vmatpush1.xpose.msra.mxu0 %v354
    %383 = vmatprep.subr.mxu0 0.0
    %384 = vmatpush1.xpose.msra.mxu0 %v353
    %385 = vmatprep.subr.mxu0 0.0
    %386 = vmatpush1.xpose.msra.mxu0 %v352
    %387 = vmatprep.subr.mxu0 0.0
    %388 = vmatpush1.xpose.msra.mxu0 %v351
    %389 = vmatprep.subr.mxu0 0.0
    %390 = vmatpush1.xpose.msra.mxu0 %v350
    %391 = vmatprep.subr.mxu0 0.0
    %392 = vmatpush1.xpose.msra.mxu0 %v349
    %393 = vmatprep.subr.mxu0 0.0
    %394 = vmatpush1.xpose.msra.mxu0 %v348
    %395 = vmatprep.subr.mxu0 0.0
    %396 = vmatpush1.xpose.msra.mxu0 %v347
    %397 = vmatprep.subr.mxu0 0.0
    %398 = vmatpush1.xpose.msra.mxu0 %v346
    %399 = vmatprep.subr.mxu0 0.0
    %400 = vmatpush1.xpose.msra.mxu0 %v345
    %401 = vmatprep.subr.mxu0 0.0
    %402 = vmatpush2.xpose.msra.mxu0 0.0
    %403 = vmatprep.subr.mxu0 0.0
    %404 = vmatpush2.xpose.msra.mxu0 0.0
    %405 = vmatprep.subr.mxu0 0.0
    %406 = vmatpush2.xpose.msra.mxu0 0.0
    %407 = vmatprep.subr.mxu0 0.0
    %408 = vmatpush2.xpose.msra.mxu0 0.0
    %409 = vmatprep.subr.mxu0 0.0
    %410 = vmatpush2.xpose.msra.mxu0 0.0
    %411 = vmatprep.subr.mxu0 0.0
    %412 = vmatpush2.xpose.msra.mxu0 0.0
    %413 = vmatprep.subr.mxu0 0.0
    %414 = vmatpush2.xpose.msra.mxu0 0.0
    %415 = vmatprep.subr.mxu0 0.0
    %416 = vmatpush2.xpose.msra.mxu0 0.0
    %417 = vmatprep.subr.mxu0 0.0
    %418 = vmatpush2.xpose.msra.mxu0 0.0
    %419 = vmatprep.subr.mxu0 0.0
    %420 = vmatpush2.xpose.msra.mxu0 0.0
    %421 = vmatprep.subr.mxu0 0.0
    %422 = vmatpush2.xpose.msra.mxu0 0.0
    %423 = vmatprep.subr.mxu0 0.0
    %424 = vmatpush2.xpose.msra.mxu0 0.0
    %425 = vmatprep.subr.mxu0 0.0
    %426 = vmatpush2.xpose.msra.mxu0 0.0
    %427 = vmatprep.subr.mxu0 0.0
    %428 = vmatpush2.xpose.msra.mxu0 0.0
    %429 = vmatprep.subr.mxu0 0.0
    %430 = vmatpush2.xpose.msra.mxu0 0.0
    %431 = vmatprep.subr.mxu0 0.0
    %432 = vmatpush2.xpose.msra.mxu0 0.0
    %433 = vmatprep.mubr.f32.mxu0 0.0
    %434 = vmatmul.mubr.f32.gmra.mxu0 %v341
    %v435 = vpop.f32.mrf.mxu0
    %v436 = vadd.f32 %v367, %v435
    %v437 = vpop.f32.mrf.mxu0
    %438 = vdwg.mxu0
    %s439 = scalar_lea.vmem [#allocation5], 512
    %v440 = vld [vmem:[%s439] sm:$0xff]
    %v441 = vld [vmem:[%s439 + $0x8] sm:$0xff]
    %v442 = vld [vmem:[%s439 + $0x10] sm:$0xff]
    %v443 = vld [vmem:[%s439 + $0x18] sm:$0xff]
    %v444 = vld [vmem:[%s439 + $0x20] sm:$0xff]
    %v445 = vld [vmem:[%s439 + $0x28] sm:$0xff]
    %v446 = vld [vmem:[%s439 + $0x30] sm:$0xff]
    %v447 = vld [vmem:[%s439 + $0x38] sm:$0xff]
    %v448 = vld [vmem:[%s439 + $0x40] sm:$0xff]
    %v449 = vld [vmem:[%s439 + $0x48] sm:$0xff]
    %v450 = vld [vmem:[%s439 + $0x50] sm:$0xff]
    %v451 = vld [vmem:[%s439 + $0x58] sm:$0xff]
    %v452 = vld [vmem:[%s439 + $0x60] sm:$0xff]
    %v453 = vld [vmem:[%s439 + $0x68] sm:$0xff]
    %v454 = vld [vmem:[%s439 + $0x70] sm:$0xff]
    %v455 = vld [vmem:[%s439 + $0x78] sm:$0xff]
    %s456 = scalar_lea.vmem [#allocation7], 4
    %v457 = vld [vmem:[%s456] sm:$0x1]
    %v459 = vlaneseq
    %v460 = vshrl.u32 %v459, 7
    %v461 = vsub.s32 0, %v460
    %v462 = vrot.slane %v457, %v461
    %464 = vmatprep.subr.mxu0 0.0
    %465 = vmatpush1.xpose.msra.mxu0 %v455
    %466 = vmatprep.subr.mxu0 0.0
    %467 = vmatpush1.xpose.msra.mxu0 %v454
    %468 = vmatprep.subr.mxu0 0.0
    %469 = vmatpush1.xpose.msra.mxu0 %v453
    %470 = vmatprep.subr.mxu0 0.0
    %471 = vmatpush1.xpose.msra.mxu0 %v452
    %472 = vmatprep.subr.mxu0 0.0
    %473 = vmatpush1.xpose.msra.mxu0 %v451
    %474 = vmatprep.subr.mxu0 0.0
    %475 = vmatpush1.xpose.msra.mxu0 %v450
    %476 = vmatprep.subr.mxu0 0.0
    %477 = vmatpush1.xpose.msra.mxu0 %v449
    %478 = vmatprep.subr.mxu0 0.0
    %479 = vmatpush1.xpose.msra.mxu0 %v448
    %480 = vmatprep.subr.mxu0 0.0
    %481 = vmatpush1.xpose.msra.mxu0 %v447
    %482 = vmatprep.subr.mxu0 0.0
    %483 = vmatpush1.xpose.msra.mxu0 %v446
    %484 = vmatprep.subr.mxu0 0.0
    %485 = vmatpush1.xpose.msra.mxu0 %v445
    %486 = vmatprep.subr.mxu0 0.0
    %487 = vmatpush1.xpose.msra.mxu0 %v444
    %488 = vmatprep.subr.mxu0 0.0
    %489 = vmatpush1.xpose.msra.mxu0 %v443
    %490 = vmatprep.subr.mxu0 0.0
    %491 = vmatpush1.xpose.msra.mxu0 %v442
    %492 = vmatprep.subr.mxu0 0.0
    %493 = vmatpush1.xpose.msra.mxu0 %v441
    %494 = vmatprep.subr.mxu0 0.0
    %495 = vmatpush1.xpose.msra.mxu0 %v440
    %496 = vmatprep.subr.mxu0 0.0
    %497 = vmatpush2.xpose.msra.mxu0 0.0
    %498 = vmatprep.subr.mxu0 0.0
    %499 = vmatpush2.xpose.msra.mxu0 0.0
    %500 = vmatprep.subr.mxu0 0.0
    %501 = vmatpush2.xpose.msra.mxu0 0.0
    %502 = vmatprep.subr.mxu0 0.0
    %503 = vmatpush2.xpose.msra.mxu0 0.0
    %504 = vmatprep.subr.mxu0 0.0
    %505 = vmatpush2.xpose.msra.mxu0 0.0
    %506 = vmatprep.subr.mxu0 0.0
    %507 = vmatpush2.xpose.msra.mxu0 0.0
    %508 = vmatprep.subr.mxu0 0.0
    %509 = vmatpush2.xpose.msra.mxu0 0.0
    %510 = vmatprep.subr.mxu0 0.0
    %511 = vmatpush2.xpose.msra.mxu0 0.0
    %512 = vmatprep.subr.mxu0 0.0
    %513 = vmatpush2.xpose.msra.mxu0 0.0
    %514 = vmatprep.subr.mxu0 0.0
    %515 = vmatpush2.xpose.msra.mxu0 0.0
    %516 = vmatprep.subr.mxu0 0.0
    %517 = vmatpush2.xpose.msra.mxu0 0.0
    %518 = vmatprep.subr.mxu0 0.0
    %519 = vmatpush2.xpose.msra.mxu0 0.0
    %520 = vmatprep.subr.mxu0 0.0
    %521 = vmatpush2.xpose.msra.mxu0 0.0
    %522 = vmatprep.subr.mxu0 0.0
    %523 = vmatpush2.xpose.msra.mxu0 0.0
    %524 = vmatprep.subr.mxu0 0.0
    %525 = vmatpush2.xpose.msra.mxu0 0.0
    %526 = vmatprep.subr.mxu0 0.0
    %527 = vmatpush2.xpose.msra.mxu0 0.0
    %528 = vmatprep.mubr.f32.mxu0 0.0
    %529 = vmatmul.mubr.f32.gmra.mxu0 %v436
    %v530 = vpop.f32.mrf.mxu0
    %v531 = vadd.f32 %v462, %v530
    %v532 = vpop.f32.mrf.mxu0
    %533 = vdwg.mxu0
    %s534 = scalar_lea.vmem [#allocation5], 640
    %v535 = vld [vmem:[%s534] sm:$0xff]
    %v536 = vld [vmem:[%s534 + $0x8] sm:$0xff]
    %v537 = vld [vmem:[%s534 + $0x10] sm:$0xff]
    %v538 = vld [vmem:[%s534 + $0x18] sm:$0xff]
    %v539 = vld [vmem:[%s534 + $0x20] sm:$0xff]
    %v540 = vld [vmem:[%s534 + $0x28] sm:$0xff]
    %v541 = vld [vmem:[%s534 + $0x30] sm:$0xff]
    %v542 = vld [vmem:[%s534 + $0x38] sm:$0xff]
    %v543 = vld [vmem:[%s534 + $0x40] sm:$0xff]
    %v544 = vld [vmem:[%s534 + $0x48] sm:$0xff]
    %v545 = vld [vmem:[%s534 + $0x50] sm:$0xff]
    %v546 = vld [vmem:[%s534 + $0x58] sm:$0xff]
    %v547 = vld [vmem:[%s534 + $0x60] sm:$0xff]
    %v548 = vld [vmem:[%s534 + $0x68] sm:$0xff]
    %v549 = vld [vmem:[%s534 + $0x70] sm:$0xff]
    %v550 = vld [vmem:[%s534 + $0x78] sm:$0xff]
    %s551 = scalar_lea.vmem [#allocation7], 5
    %v552 = vld [vmem:[%s551] sm:$0x1]
    %v554 = vlaneseq
    %v555 = vshrl.u32 %v554, 7
    %v556 = vsub.s32 0, %v555
    %v557 = vrot.slane %v552, %v556
    %559 = vmatprep.subr.mxu0 0.0
    %560 = vmatpush1.xpose.msra.mxu0 %v550
    %561 = vmatprep.subr.mxu0 0.0
    %562 = vmatpush1.xpose.msra.mxu0 %v549
    %563 = vmatprep.subr.mxu0 0.0
    %564 = vmatpush1.xpose.msra.mxu0 %v548
    %565 = vmatprep.subr.mxu0 0.0
    %566 = vmatpush1.xpose.msra.mxu0 %v547
    %567 = vmatprep.subr.mxu0 0.0
    %568 = vmatpush1.xpose.msra.mxu0 %v546
    %569 = vmatprep.subr.mxu0 0.0
    %570 = vmatpush1.xpose.msra.mxu0 %v545
    %571 = vmatprep.subr.mxu0 0.0
    %572 = vmatpush1.xpose.msra.mxu0 %v544
    %573 = vmatprep.subr.mxu0 0.0
    %574 = vmatpush1.xpose.msra.mxu0 %v543
    %575 = vmatprep.subr.mxu0 0.0
    %576 = vmatpush1.xpose.msra.mxu0 %v542
    %577 = vmatprep.subr.mxu0 0.0
    %578 = vmatpush1.xpose.msra.mxu0 %v541
    %579 = vmatprep.subr.mxu0 0.0
    %580 = vmatpush1.xpose.msra.mxu0 %v540
    %581 = vmatprep.subr.mxu0 0.0
    %582 = vmatpush1.xpose.msra.mxu0 %v539
    %583 = vmatprep.subr.mxu0 0.0
    %584 = vmatpush1.xpose.msra.mxu0 %v538
    %585 = vmatprep.subr.mxu0 0.0
    %586 = vmatpush1.xpose.msra.mxu0 %v537
    %587 = vmatprep.subr.mxu0 0.0
    %588 = vmatpush1.xpose.msra.mxu0 %v536
    %589 = vmatprep.subr.mxu0 0.0
    %590 = vmatpush1.xpose.msra.mxu0 %v535
    %591 = vmatprep.subr.mxu0 0.0
    %592 = vmatpush2.xpose.msra.mxu0 0.0
    %593 = vmatprep.subr.mxu0 0.0
    %594 = vmatpush2.xpose.msra.mxu0 0.0
    %595 = vmatprep.subr.mxu0 0.0
    %596 = vmatpush2.xpose.msra.mxu0 0.0
    %597 = vmatprep.subr.mxu0 0.0
    %598 = vmatpush2.xpose.msra.mxu0 0.0
    %599 = vmatprep.subr.mxu0 0.0
    %600 = vmatpush2.xpose.msra.mxu0 0.0
    %601 = vmatprep.subr.mxu0 0.0
    %602 = vmatpush2.xpose.msra.mxu0 0.0
    %603 = vmatprep.subr.mxu0 0.0
    %604 = vmatpush2.xpose.msra.mxu0 0.0
    %605 = vmatprep.subr.mxu0 0.0
    %606 = vmatpush2.xpose.msra.mxu0 0.0
    %607 = vmatprep.subr.mxu0 0.0
    %608 = vmatpush2.xpose.msra.mxu0 0.0
    %609 = vmatprep.subr.mxu0 0.0
    %610 = vmatpush2.xpose.msra.mxu0 0.0
    %611 = vmatprep.subr.mxu0 0.0
    %612 = vmatpush2.xpose.msra.mxu0 0.0
    %613 = vmatprep.subr.mxu0 0.0
    %614 = vmatpush2.xpose.msra.mxu0 0.0
    %615 = vmatprep.subr.mxu0 0.0
    %616 = vmatpush2.xpose.msra.mxu0 0.0
    %617 = vmatprep.subr.mxu0 0.0
    %618 = vmatpush2.xpose.msra.mxu0 0.0
    %619 = vmatprep.subr.mxu0 0.0
    %620 = vmatpush2.xpose.msra.mxu0 0.0
    %621 = vmatprep.subr.mxu0 0.0
    %622 = vmatpush2.xpose.msra.mxu0 0.0
    %623 = vmatprep.mubr.f32.mxu0 0.0
    %624 = vmatmul.mubr.f32.gmra.mxu0 %v531
    %v625 = vpop.f32.mrf.mxu0
    %v626 = vadd.f32 %v557, %v625
    %v627 = vpop.f32.mrf.mxu0
    %628 = vdwg.mxu0
    %s629 = scalar_lea.vmem [#allocation5], 768
    %v630 = vld [vmem:[%s629] sm:$0xff]
    %v631 = vld [vmem:[%s629 + $0x8] sm:$0xff]
    %v632 = vld [vmem:[%s629 + $0x10] sm:$0xff]
    %v633 = vld [vmem:[%s629 + $0x18] sm:$0xff]
    %v634 = vld [vmem:[%s629 + $0x20] sm:$0xff]
    %v635 = vld [vmem:[%s629 + $0x28] sm:$0xff]
    %v636 = vld [vmem:[%s629 + $0x30] sm:$0xff]
    %v637 = vld [vmem:[%s629 + $0x38] sm:$0xff]
    %v638 = vld [vmem:[%s629 + $0x40] sm:$0xff]
    %v639 = vld [vmem:[%s629 + $0x48] sm:$0xff]
    %v640 = vld [vmem:[%s629 + $0x50] sm:$0xff]
    %v641 = vld [vmem:[%s629 + $0x58] sm:$0xff]
    %v642 = vld [vmem:[%s629 + $0x60] sm:$0xff]
    %v643 = vld [vmem:[%s629 + $0x68] sm:$0xff]
    %v644 = vld [vmem:[%s629 + $0x70] sm:$0xff]
    %v645 = vld [vmem:[%s629 + $0x78] sm:$0xff]
    %s646 = scalar_lea.vmem [#allocation7], 6
    %v647 = vld [vmem:[%s646] sm:$0x1]
    %v649 = vlaneseq
    %v650 = vshrl.u32 %v649, 7
    %v651 = vsub.s32 0, %v650
    %v652 = vrot.slane %v647, %v651
    %654 = vmatprep.subr.mxu0 0.0
    %655 = vmatpush1.xpose.msra.mxu0 %v645
    %656 = vmatprep.subr.mxu0 0.0
    %657 = vmatpush1.xpose.msra.mxu0 %v644
    %658 = vmatprep.subr.mxu0 0.0
    %659 = vmatpush1.xpose.msra.mxu0 %v643
    %660 = vmatprep.subr.mxu0 0.0
    %661 = vmatpush1.xpose.msra.mxu0 %v642
    %662 = vmatprep.subr.mxu0 0.0
    %663 = vmatpush1.xpose.msra.mxu0 %v641
    %664 = vmatprep.subr.mxu0 0.0
    %665 = vmatpush1.xpose.msra.mxu0 %v640
    %666 = vmatprep.subr.mxu0 0.0
    %667 = vmatpush1.xpose.msra.mxu0 %v639
    %668 = vmatprep.subr.mxu0 0.0
    %669 = vmatpush1.xpose.msra.mxu0 %v638
    %670 = vmatprep.subr.mxu0 0.0
    %671 = vmatpush1.xpose.msra.mxu0 %v637
    %672 = vmatprep.subr.mxu0 0.0
    %673 = vmatpush1.xpose.msra.mxu0 %v636
    %674 = vmatprep.subr.mxu0 0.0
    %675 = vmatpush1.xpose.msra.mxu0 %v635
    %676 = vmatprep.subr.mxu0 0.0
    %677 = vmatpush1.xpose.msra.mxu0 %v634
    %678 = vmatprep.subr.mxu0 0.0
    %679 = vmatpush1.xpose.msra.mxu0 %v633
    %680 = vmatprep.subr.mxu0 0.0
    %681 = vmatpush1.xpose.msra.mxu0 %v632
    %682 = vmatprep.subr.mxu0 0.0
    %683 = vmatpush1.xpose.msra.mxu0 %v631
    %684 = vmatprep.subr.mxu0 0.0
    %685 = vmatpush1.xpose.msra.mxu0 %v630
    %686 = vmatprep.subr.mxu0 0.0
    %687 = vmatpush2.xpose.msra.mxu0 0.0
    %688 = vmatprep.subr.mxu0 0.0
    %689 = vmatpush2.xpose.msra.mxu0 0.0
    %690 = vmatprep.subr.mxu0 0.0
    %691 = vmatpush2.xpose.msra.mxu0 0.0
    %692 = vmatprep.subr.mxu0 0.0
    %693 = vmatpush2.xpose.msra.mxu0 0.0
    %694 = vmatprep.subr.mxu0 0.0
    %695 = vmatpush2.xpose.msra.mxu0 0.0
    %696 = vmatprep.subr.mxu0 0.0
    %697 = vmatpush2.xpose.msra.mxu0 0.0
    %698 = vmatprep.subr.mxu0 0.0
    %699 = vmatpush2.xpose.msra.mxu0 0.0
    %700 = vmatprep.subr.mxu0 0.0
    %701 = vmatpush2.xpose.msra.mxu0 0.0
    %702 = vmatprep.subr.mxu0 0.0
    %703 = vmatpush2.xpose.msra.mxu0 0.0
    %704 = vmatprep.subr.mxu0 0.0
    %705 = vmatpush2.xpose.msra.mxu0 0.0
    %706 = vmatprep.subr.mxu0 0.0
    %707 = vmatpush2.xpose.msra.mxu0 0.0
    %708 = vmatprep.subr.mxu0 0.0
    %709 = vmatpush2.xpose.msra.mxu0 0.0
    %710 = vmatprep.subr.mxu0 0.0
    %711 = vmatpush2.xpose.msra.mxu0 0.0
    %712 = vmatprep.subr.mxu0 0.0
    %713 = vmatpush2.xpose.msra.mxu0 0.0
    %714 = vmatprep.subr.mxu0 0.0
    %715 = vmatpush2.xpose.msra.mxu0 0.0
    %716 = vmatprep.subr.mxu0 0.0
    %717 = vmatpush2.xpose.msra.mxu0 0.0
    %718 = vmatprep.mubr.f32.mxu0 0.0
    %719 = vmatmul.mubr.f32.gmra.mxu0 %v626
    %v720 = vpop.f32.mrf.mxu0
    %v721 = vadd.f32 %v652, %v720
    %v722 = vpop.f32.mrf.mxu0
    %723 = vdwg.mxu0
    %s724 = scalar_lea.vmem [#allocation5], 896
    %v725 = vld [vmem:[%s724] sm:$0xff]
    %v726 = vld [vmem:[%s724 + $0x8] sm:$0xff]
    %v727 = vld [vmem:[%s724 + $0x10] sm:$0xff]
    %v728 = vld [vmem:[%s724 + $0x18] sm:$0xff]
    %v729 = vld [vmem:[%s724 + $0x20] sm:$0xff]
    %v730 = vld [vmem:[%s724 + $0x28] sm:$0xff]
    %v731 = vld [vmem:[%s724 + $0x30] sm:$0xff]
    %v732 = vld [vmem:[%s724 + $0x38] sm:$0xff]
    %v733 = vld [vmem:[%s724 + $0x40] sm:$0xff]
    %v734 = vld [vmem:[%s724 + $0x48] sm:$0xff]
    %v735 = vld [vmem:[%s724 + $0x50] sm:$0xff]
    %v736 = vld [vmem:[%s724 + $0x58] sm:$0xff]
    %v737 = vld [vmem:[%s724 + $0x60] sm:$0xff]
    %v738 = vld [vmem:[%s724 + $0x68] sm:$0xff]
    %v739 = vld [vmem:[%s724 + $0x70] sm:$0xff]
    %v740 = vld [vmem:[%s724 + $0x78] sm:$0xff]
    %s741 = scalar_lea.vmem [#allocation7], 7
    %v742 = vld [vmem:[%s741] sm:$0x1]
    %v744 = vlaneseq
    %v745 = vshrl.u32 %v744, 7
    %v746 = vsub.s32 0, %v745
    %v747 = vrot.slane %v742, %v746
    %749 = vmatprep.subr.mxu0 0.0
    %750 = vmatpush1.xpose.msra.mxu0 %v740
    %751 = vmatprep.subr.mxu0 0.0
    %752 = vmatpush1.xpose.msra.mxu0 %v739
    %753 = vmatprep.subr.mxu0 0.0
    %754 = vmatpush1.xpose.msra.mxu0 %v738
    %755 = vmatprep.subr.mxu0 0.0
    %756 = vmatpush1.xpose.msra.mxu0 %v737
    %757 = vmatprep.subr.mxu0 0.0
    %758 = vmatpush1.xpose.msra.mxu0 %v736
    %759 = vmatprep.subr.mxu0 0.0
    %760 = vmatpush1.xpose.msra.mxu0 %v735
    %761 = vmatprep.subr.mxu0 0.0
    %762 = vmatpush1.xpose.msra.mxu0 %v734
    %763 = vmatprep.subr.mxu0 0.0
    %764 = vmatpush1.xpose.msra.mxu0 %v733
    %765 = vmatprep.subr.mxu0 0.0
    %766 = vmatpush1.xpose.msra.mxu0 %v732
    %767 = vmatprep.subr.mxu0 0.0
    %768 = vmatpush1.xpose.msra.mxu0 %v731
    %769 = vmatprep.subr.mxu0 0.0
    %770 = vmatpush1.xpose.msra.mxu0 %v730
    %771 = vmatprep.subr.mxu0 0.0
    %772 = vmatpush1.xpose.msra.mxu0 %v729
    %773 = vmatprep.subr.mxu0 0.0
    %774 = vmatpush1.xpose.msra.mxu0 %v728
    %775 = vmatprep.subr.mxu0 0.0
    %776 = vmatpush1.xpose.msra.mxu0 %v727
    %777 = vmatprep.subr.mxu0 0.0
    %778 = vmatpush1.xpose.msra.mxu0 %v726
    %779 = vmatprep.subr.mxu0 0.0
    %780 = vmatpush1.xpose.msra.mxu0 %v725
    %781 = vmatprep.subr.mxu0 0.0
    %782 = vmatpush2.xpose.msra.mxu0 0.0
    %783 = vmatprep.subr.mxu0 0.0
    %784 = vmatpush2.xpose.msra.mxu0 0.0
    %785 = vmatprep.subr.mxu0 0.0
    %786 = vmatpush2.xpose.msra.mxu0 0.0
    %787 = vmatprep.subr.mxu0 0.0
    %788 = vmatpush2.xpose.msra.mxu0 0.0
    %789 = vmatprep.subr.mxu0 0.0
    %790 = vmatpush2.xpose.msra.mxu0 0.0
    %791 = vmatprep.subr.mxu0 0.0
    %792 = vmatpush2.xpose.msra.mxu0 0.0
    %793 = vmatprep.subr.mxu0 0.0
    %794 = vmatpush2.xpose.msra.mxu0 0.0
    %795 = vmatprep.subr.mxu0 0.0
    %796 = vmatpush2.xpose.msra.mxu0 0.0
    %797 = vmatprep.subr.mxu0 0.0
    %798 = vmatpush2.xpose.msra.mxu0 0.0
    %799 = vmatprep.subr.mxu0 0.0
    %800 = vmatpush2.xpose.msra.mxu0 0.0
    %801 = vmatprep.subr.mxu0 0.0
    %802 = vmatpush2.xpose.msra.mxu0 0.0
    %803 = vmatprep.subr.mxu0 0.0
    %804 = vmatpush2.xpose.msra.mxu0 0.0
    %805 = vmatprep.subr.mxu0 0.0
    %806 = vmatpush2.xpose.msra.mxu0 0.0
    %807 = vmatprep.subr.mxu0 0.0
    %808 = vmatpush2.xpose.msra.mxu0 0.0
    %809 = vmatprep.subr.mxu0 0.0
    %810 = vmatpush2.xpose.msra.mxu0 0.0
    %811 = vmatprep.subr.mxu0 0.0
    %812 = vmatpush2.xpose.msra.mxu0 0.0
    %813 = vmatprep.mubr.f32.mxu0 0.0
    %814 = vmatmul.mubr.f32.gmra.mxu0 %v721
    %v815 = vpop.f32.mrf.mxu0
    %v816 = vadd.f32 %v747, %v815
    %v817 = vpop.f32.mrf.mxu0
    %818 = vdwg.mxu0
    %819 = vst [vmem:[#allocation8] sm:$0xff] %v816
    // Predicated region
    $region30: #{scanned_linear_forward.1} parent=1 // pred_check
      _
    $region31: #{scanned_linear_forward.1} parent=1 // pred_check_branch
      %821 = sbr.rel (0) target = $region33
    $region32: #{scanned_linear_forward.1} parent=1 // pred_region
      %s823 = ssub.s32 128, 128
      %824 = vsyncadd [#allocation4], %s823
      %s826 = sshll.u32 [#allocation8], 4
      %s827 = int_to_ptr.vmem [resolvable:$true] %s826
      %829 = dma.vmem_to_hbm [thread:$0]  %s827, 128, %s3, [#allocation4]
    $region33: #{scanned_linear_forward.1} parent=1 // pred_fallthru
      _
    // Predicated region
    $region34: #{scanned_linear_forward.1} parent=1 // pred_check
      _
    $region35: #{scanned_linear_forward.1} parent=1 // pred_check_branch
      %831 = sbr.rel (0) target = $region37
    $region36: #{scanned_linear_forward.1} parent=1 // pred_region
      %832 = dma.done [#allocation4], 128
    $region37: #{scanned_linear_forward.1} parent=1 // pred_fallthru
      _
    %833 = vsyncpa [#allocation3], 1
    %834 = vsyncpa [#allocation6], 1
    %835 = vsyncpa [#allocation4], 1

</llo_original>
